<compile_context>
chip_gen: v5e
topology: v5e:2x2
jax: 0.10.0
libtpu: 0.0.40
codegen_flags: <defaults>
</compile_context>

<pallas_src>
import jax
import jax.numpy as jnp
from jax.experimental import pallas as pl
from jax.experimental.pallas import tpu as pltpu


_LANE = 128                      # minimum lane-dense width
_BLOCK_BYTES = 2 * 1024 * 1024   # 2 MiB/block; ~8 MiB live with dbl-buffered in+out
_LANE_CHOICES = (4096, 2048, 1024, 512, 256, 128)


def _relu_kernel(x_ref, o_ref):
    # Elementwise ReLU on the VMEM tile (VPU slot). Zero in the input dtype
    # avoids any weak-type promotion surprises for non-float dtypes.
    o_ref[...] = jnp.maximum(x_ref[...], jnp.zeros((), x_ref.dtype))


def _sublane(dtype) -> int:
    # Full-vreg sublane count: 8 for 4-byte, 16 for 2-byte, 32 for 1-byte dtypes.
    return max(8, 32 // max(1, jnp.dtype(dtype).itemsize))


def _pick_lane_width(total: int) -> int:
    """Largest convenient multiple of 128 that divides `total` (0 if none)."""
    for c in _LANE_CHOICES:
        if total % c == 0:
            return c
    return 0


def _tiled_relu_2d(x2d: jax.Array, alias: dict) -> jax.Array:
    """Row-tiled ReLU over a (rows, C) array with C a multiple of 128."""
    rows, c = x2d.shape
    dtype = x2d.dtype
    itemsize = jnp.dtype(dtype).itemsize
    sub = _sublane(dtype)

    # Row budget per block from the byte budget, rounded down to a full-vreg
    # sublane multiple (dtype-aware).
    budget_rows = max(sub, (_BLOCK_BYTES // (c * itemsize)) // sub * sub)
    # Clamp to the real extent when everything fits in one block: full-extent
    # block dims are legal and avoid partial-block masking / dead DMA bytes.
    tile_rows = rows if rows <= budget_rows else budget_rows

    grid = (pl.cdiv(rows, tile_rows),)
    return pl.pallas_call(
        _relu_kernel,
        out_shape=jax.ShapeDtypeStruct((rows, c), dtype),
        grid=grid,
        in_specs=[pl.BlockSpec((tile_rows, c), lambda i: (i, 0))],
        out_specs=pl.BlockSpec((tile_rows, c), lambda i: (i, 0)),
        compiler_params=pltpu.CompilerParams(
            # Pays off on v7x's 2 TensorCores whenever grid >= 2; harmless
            # elsewhere / for single-step grids.
            dimension_semantics=("parallel",),
        ),
        input_output_aliases=alias,
    )(x2d)


def relu_pallas(x: jax.Array, *, donate_input: bool = False) -> jax.Array:
    """Applies ReLU to a tensor of any shape using a tiled Pallas TPU kernel.

    NOTE: for tiny activations (like this module's 1x32x28x28 input) prefer
    fusing ReLU into the producer kernel or plain `jnp.maximum(x, 0)`.
    """
    orig_shape = x.shape
    dtype = x.dtype
    total = x.size

    if total == 0:
        return x  # ReLU of an empty tensor is the empty tensor.

    itemsize = jnp.dtype(dtype).itemsize
    alias = {0: 0} if donate_input else {}

    c = _pick_lane_width(total)
    if c:
        # Hot path (covers this module's shapes): pure reshape, no extra HBM copy.
        out2d = _tiled_relu_2d(x.reshape(total // c, c), alias)
        return out2d.reshape(orig_shape)

    if total * itemsize <= _BLOCK_BYTES:
        # Ragged but small: one full-extent block (legal block_shape), no
        # pad/slice HBM passes, Pallas handles the non-128 lane extent.
        out2d = pl.pallas_call(
            _relu_kernel,
            out_shape=jax.ShapeDtypeStruct((1, total), dtype),
            grid=(1,),
            in_specs=[pl.BlockSpec((1, total), lambda i: (0, 0))],
            out_specs=pl.BlockSpec((1, total), lambda i: (0, 0)),
            input_output_aliases=alias,
        )(x.reshape(1, total))
        return out2d.reshape(orig_shape)

    # TODO(synk): large + ragged tensors still pay one pad + one slice HBM pass;
    # an in-kernel lane-tail mask (SMEM scalar + broadcasted_iota) would avoid it.
    rows = pl.cdiv(total, _LANE)
    pad = rows * _LANE - total
    x2d = jnp.pad(x.reshape(-1), (0, pad)).reshape(rows, _LANE)
    out2d = _tiled_relu_2d(x2d, {})  # padded temp: never alias the original input
    return out2d.reshape(-1)[:total].reshape(orig_shape)


if __name__ == "__main__":
    # Module input: x38 = torch.randn([1, 32, 28, 28])
    key = jax.random.PRNGKey(0)
    x38 = jax.random.normal(key, (1, 32, 28, 28), dtype=jnp.float32)

    y = relu_pallas(x38)
    jax.block_until_ready(y)

    # Correctness check against plain JAX reference.
    ref = jnp.maximum(x38, 0.0)
    assert y.shape == x38.shape
    assert y.dtype == x38.dtype
    assert bool(jnp.allclose(y, ref)), "mismatch vs reference ReLU"

    print("KERNEL_OK")
</pallas_src>

<mosaic_0001>
module attributes {stable_mosaic.version = 11 : i64} {
  func.func @_relu_kernel(%arg0: i32, %arg1: memref<49x512xf32, #tpu.memory_space<vmem>>, %arg2: memref<49x512xf32, #tpu.memory_space<vmem>>) attributes {dimension_semantics = [#tpu.dimension_semantics<parallel>], iteration_bounds = array<i64: 1>, scalar_prefetch = 0 : i64, scratch_operands = 0 : i64, tpu.core_type = #tpu.core_type<tc>, window_params = [{transform_indices = @transform_0, window_bounds = array<i64: 49, 512>}, {transform_indices = @transform_1, window_bounds = array<i64: 49, 512>}]} {
    %c0 = arith.constant 0 : index
    %c0_0 = arith.constant 0 : index
    %0 = vector.load %arg1[%c0, %c0_0] : memref<49x512xf32, #tpu.memory_space<vmem>>, vector<49x512xf32>
    %cst = arith.constant 0.000000e+00 : f32
    %1 = vector.broadcast %cst : f32 to vector<49x512xf32>
    %2 = arith.maximumf %0, %1 : vector<49x512xf32>
    %c0_1 = arith.constant 0 : index
    %c0_2 = arith.constant 0 : index
    %3 = vector.load %arg2[%c0_1, %c0_2] : memref<49x512xf32, #tpu.memory_space<vmem>>, vector<49x512xf32>
    tpu.vector_store %arg2[%c0_1, %c0_2], %2 {strides = array<i32>} : memref<49x512xf32, #tpu.memory_space<vmem>>, vector<49x512xf32>,
    return
  }
  func.func @transform_0(%arg0: i32) -> (i32, i32) {
    %c0_i32 = arith.constant 0 : i32
    %c0_i32_0 = arith.constant 0 : i32
    return %arg0, %c0_i32 : i32, i32
  }
  func.func @transform_1(%arg0: i32) -> (i32, i32) {
    %c0_i32 = arith.constant 0 : i32
    %c0_i32_0 = arith.constant 0 : i32
    return %arg0, %c0_i32 : i32, i32
  }
}

</mosaic_0001>

<llo_original>
// kernel: tpu_custom_call.1
$region0: #{tpu_custom_call.1}
  #allocation0 [shape = 'u32[]', space=smem, size = 0x4, offset = 0x4, fixed_abs, tag = 'smem constant byte address 0x4 - core index']
  #allocation1 [shape = 'u32[72,128]{1,0:T(1,128)}', space=vmem, size = 0x9000, scoped, tag = 'internal scratch']
  %s0 = inlined_call_operand.hbm [shape: f32[49,512], index: 0, kind: input, shape index: {}]
  %s1 = inlined_call_operand.hbm [shape: f32[49,512], index: 1, kind: output, shape index: {}]
  %s2 = sld [smem:[#allocation0]]
  $region18: #{tpu_custom_call.1} parent=0
    _
  %s4 = ssub.s32 1, %s2
  %s5 = scalar_select 0, %s4, %s2
  $region1: #{tpu_custom_call.1} parent=0
    #allocation2 [shape = 'u8[114688]{0}', space=vmem, size = 0x1c000, scoped, tag = 'input window, operand 0, single buffered']
    #allocation3 [shape = 's32[1]{0}', space=sflag, size = 0x4, scoped, tag = 'scoped memory for tpu_custom_call.1']
    #allocation4 [shape = 's32[1]{0}', space=sflag, size = 0x4, scoped, tag = 'scoped memory for tpu_custom_call.1']
    #allocation5 [shape = 'u8[114688]{0}', space=vmem, size = 0x1c000, scoped, tag = 'output window, operand 0, single buffered']
    %6 = vsyncpa [#allocation3], 0
    %7 = vsyncpa [#allocation4], 0
    // Predicated region
    $region2: #{tpu_custom_call.1} parent=1 // pred_check
      _
    $region3: #{tpu_custom_call.1} parent=1 // pred_check_branch
      %9 = sbr.rel (0) target = $region5
    $region4: #{tpu_custom_call.1} parent=1 // pred_region
      %11 = vsyncadd [#allocation3], 0
      %s12 = sshll.u32 %s0, 4
      %s13 = int_to_ptr.hbm [resolvable:$true] %s12
      %s14 = sshll.u32 [#allocation2], 4
      %s15 = int_to_ptr.vmem [resolvable:$true] %s14
      %20 = dma.hbm_to_vmem [thread:$0]  %s13, 3584, %s15, [#allocation3], 512, 512, 32
    $region5: #{tpu_custom_call.1} parent=1 // pred_fallthru
      _
    // Predicated region
    $region6: #{tpu_custom_call.1} parent=1 // pred_check
      _
    $region7: #{tpu_custom_call.1} parent=1 // pred_check_branch
      %22 = sbr.rel (0) target = $region9
    $region8: #{tpu_custom_call.1} parent=1 // pred_region
      %24 = dma.done [#allocation3], 3584
    $region9: #{tpu_custom_call.1} parent=1 // pred_fallthru
      _
    %v25 = vld [vmem:[#allocation2] sm:$0xff]
    %v26 = vld [vmem:[#allocation2 + $0x8] sm:$0xff]
    %v27 = vld [vmem:[#allocation2 + $0x10] sm:$0xff]
    %v28 = vld [vmem:[#allocation2 + $0x18] sm:$0xff]
    %v29 = vld [vmem:[#allocation2 + $0x20] sm:$0xff]
    %v30 = vld [vmem:[#allocation2 + $0x28] sm:$0xff]
    %v31 = vld [vmem:[#allocation2 + $0x30] sm:$0xff]
    %v32 = vld [vmem:[#allocation2 + $0x38] sm:$0xff]
    %v33 = vld [vmem:[#allocation2 + $0x40] sm:$0xff]
    %v34 = vld [vmem:[#allocation2 + $0x48] sm:$0xff]
    %v35 = vld [vmem:[#allocation2 + $0x50] sm:$0xff]
    %v36 = vld [vmem:[#allocation2 + $0x58] sm:$0xff]
    %v37 = vld [vmem:[#allocation2 + $0x60] sm:$0xff]
    %v38 = vld [vmem:[#allocation2 + $0x68] sm:$0xff]
    %v39 = vld [vmem:[#allocation2 + $0x70] sm:$0xff]
    %v40 = vld [vmem:[#allocation2 + $0x78] sm:$0xff]
    %v41 = vld [vmem:[#allocation2 + $0x80] sm:$0xff]
    %v42 = vld [vmem:[#allocation2 + $0x88] sm:$0xff]
    %v43 = vld [vmem:[#allocation2 + $0x90] sm:$0xff]
    %v44 = vld [vmem:[#allocation2 + $0x98] sm:$0xff]
    %v45 = vld [vmem:[#allocation2 + $0xa0] sm:$0xff]
    %v46 = vld [vmem:[#allocation2 + $0xa8] sm:$0xff]
    %v47 = vld [vmem:[#allocation2 + $0xb0] sm:$0xff]
    %v48 = vld [vmem:[#allocation2 + $0xb8] sm:$0xff]
    %v49 = vld [vmem:[#allocation2 + $0xc0] sm:$0x1]
    %v50 = vld [vmem:[#allocation2 + $0xc8] sm:$0x1]
    %v51 = vld [vmem:[#allocation2 + $0xd0] sm:$0x1]
    %v52 = vld [vmem:[#allocation2 + $0xd8] sm:$0x1]
    %v53 = vmax.f32 %v25, 0.0
    %v54 = vmax.f32 %v26, 0.0
    %v55 = vmax.f32 %v27, 0.0
    %v56 = vmax.f32 %v28, 0.0
    %v57 = vmax.f32 %v29, 0.0
    %v58 = vmax.f32 %v30, 0.0
    %v59 = vmax.f32 %v31, 0.0
    %v60 = vmax.f32 %v32, 0.0
    %v61 = vmax.f32 %v33, 0.0
    %v62 = vmax.f32 %v34, 0.0
    %v63 = vmax.f32 %v35, 0.0
    %v64 = vmax.f32 %v36, 0.0
    %v65 = vmax.f32 %v37, 0.0
    %v66 = vmax.f32 %v38, 0.0
    %v67 = vmax.f32 %v39, 0.0
    %v68 = vmax.f32 %v40, 0.0
    %v69 = vmax.f32 %v41, 0.0
    %v70 = vmax.f32 %v42, 0.0
    %v71 = vmax.f32 %v43, 0.0
    %v72 = vmax.f32 %v44, 0.0
    %v73 = vmax.f32 %v45, 0.0
    %v74 = vmax.f32 %v46, 0.0
    %v75 = vmax.f32 %v47, 0.0
    %v76 = vmax.f32 %v48, 0.0
    %v77 = vmax.f32 %v49, 0.0
    %v78 = vmax.f32 %v50, 0.0
    %v79 = vmax.f32 %v51, 0.0
    %v80 = vmax.f32 %v52, 0.0
    %81 = vst [vmem:[#allocation5] sm:$0xff] %v53
    %82 = vst [vmem:[#allocation5 + $0x8] sm:$0xff] %v54
    %83 = vst [vmem:[#allocation5 + $0x10] sm:$0xff] %v55
    %84 = vst [vmem:[#allocation5 + $0x18] sm:$0xff] %v56
    %85 = vst [vmem:[#allocation5 + $0x20] sm:$0xff] %v57
    %86 = vst [vmem:[#allocation5 + $0x28] sm:$0xff] %v58
    %87 = vst [vmem:[#allocation5 + $0x30] sm:$0xff] %v59
    %88 = vst [vmem:[#allocation5 + $0x38] sm:$0xff] %v60
    %89 = vst [vmem:[#allocation5 + $0x40] sm:$0xff] %v61
    %90 = vst [vmem:[#allocation5 + $0x48] sm:$0xff] %v62
    %91 = vst [vmem:[#allocation5 + $0x50] sm:$0xff] %v63
    %92 = vst [vmem:[#allocation5 + $0x58] sm:$0xff] %v64
    %93 = vst [vmem:[#allocation5 + $0x60] sm:$0xff] %v65
    %94 = vst [vmem:[#allocation5 + $0x68] sm:$0xff] %v66
    %95 = vst [vmem:[#allocation5 + $0x70] sm:$0xff] %v67
    %96 = vst [vmem:[#allocation5 + $0x78] sm:$0xff] %v68
    %97 = vst [vmem:[#allocation5 + $0x80] sm:$0xff] %v69
    %98 = vst [vmem:[#allocation5 + $0x88] sm:$0xff] %v70
    %99 = vst [vmem:[#allocation5 + $0x90] sm:$0xff] %v71
    %100 = vst [vmem:[#allocation5 + $0x98] sm:$0xff] %v72
    %101 = vst [vmem:[#allocation5 + $0xa0] sm:$0xff] %v73
    %102 = vst [vmem:[#allocation5 + $0xa8] sm:$0xff] %v74
    %103 = vst [vmem:[#allocation5 + $0xb0] sm:$0xff] %v75
    %104 = vst [vmem:[#allocation5 + $0xb8] sm:$0xff] %v76
    %105 = vst [vmem:[#allocation5 + $0xc0] sm:$0x1] %v77
    %106 = vst [vmem:[#allocation5 + $0xc8] sm:$0x1] %v78
    %107 = vst [vmem:[#allocation5 + $0xd0] sm:$0x1] %v79
    %108 = vst [vmem:[#allocation5 + $0xd8] sm:$0x1] %v80
    // Predicated region
    $region10: #{tpu_custom_call.1} parent=1 // pred_check
      _
    $region11: #{tpu_custom_call.1} parent=1 // pred_check_branch
      %110 = sbr.rel (0) target = $region13
    $region12: #{tpu_custom_call.1} parent=1 // pred_region
      %112 = vsyncadd [#allocation4], 0
      %s113 = sshll.u32 [#allocation5], 4
      %s114 = int_to_ptr.vmem [resolvable:$true] %s113
      %s115 = sshll.u32 %s1, 4
      %s116 = int_to_ptr.hbm [resolvable:$true] %s115
      %121 = dma.vmem_to_hbm [thread:$0]  %s114, 3584, %s116, [#allocation4], 512, 512, 32
    $region13: #{tpu_custom_call.1} parent=1 // pred_fallthru
      _
    // Predicated region
    $region14: #{tpu_custom_call.1} parent=1 // pred_check
      _
    $region15: #{tpu_custom_call.1} parent=1 // pred_check_branch
      %123 = sbr.rel (0) target = $region17
    $region16: #{tpu_custom_call.1} parent=1 // pred_region
      %125 = dma.done [#allocation4], 3584
    $region17: #{tpu_custom_call.1} parent=1 // pred_fallthru
      _
    %126 = vsyncpa [#allocation3], 1
    %127 = vsyncpa [#allocation4], 1

</llo_original>
